<compile_context>
chip_gen: v7x
topology: tpu7x:2x2x1
jax: 0.10.0
libtpu: 0.0.40
codegen_flags: <defaults>
</compile_context>

<pallas_src>
import jax
import jax.numpy as jnp
from jax.experimental import pallas as pl
from jax.experimental.pallas import tpu as pltpu


_SOFTPLUS_THRESHOLD = 20.0  # matches torch.nn.functional.softplus default
_CLAMP_MIN = 1e-4
_CLAMP_MAX = 1e4

_LANES = 128
_SMALL_INPUT_BYTES = 256 * 1024  # below this, plain jnp (XLA fuses it anyway)


def _dispact_math_f32(xf):
    safe_x = jnp.minimum(xf, _SOFTPLUS_THRESHOLD)        # avoid exp overflow
    sp = jnp.where(xf > _SOFTPLUS_THRESHOLD, xf, jnp.log1p(jnp.exp(safe_x)))
    return jnp.clip(sp, _CLAMP_MIN, _CLAMP_MAX)


def _dispact_kernel(x_ref, o_ref):
    # Load in native dtype; exp/log1p in f32 for accuracy near the clamp floor.
    xf = x_ref[...].astype(jnp.float32)
    o_ref[...] = _dispact_math_f32(xf).astype(o_ref.dtype)


def _dispact_jax(x):
    # pure-JAX path, mirrors torch.clamp(F.softplus(x), 1e-4, 1e4)
    return _dispact_math_f32(x.astype(jnp.float32)).astype(x.dtype)


def _device_kind():
    try:
        return jax.devices()[0].device_kind.lower()
    except Exception:
        return ""


def disp_act(x, *, force_pallas: bool = False):
    """Apply DispAct elementwise via a Pallas TPU kernel. Any input shape."""
    orig_shape = x.shape
    dtype = x.dtype
    n = x.size
    if n == 0:
        return x

    itemsize = jnp.dtype(dtype).itemsize

    # Tiny activations: launch/pipeline overhead dominates; let XLA fuse it.
    if not force_pallas and n * itemsize < _SMALL_INPUT_BYTES:
        return _dispact_jax(x)

    is_v7 = "v7" in _device_kind()

    # ~4 MiB blocks on v5e/v6e; ~8 MiB on v7x (3.2 TB/s HBM, 64 MiB VMEM/TC).
    target_block_bytes = (8 << 20) if is_v7 else (4 << 20)
    # Double-buffered in+out = 4x block -> 16 MiB (v5e/v6e) / 32 MiB (v7x);
    # give explicit headroom so the scoped-VMEM default never bites.
    vmem_limit_bytes = (48 << 20) if is_v7 else (32 << 20)

    # Packing-aware sublane multiple: f32 -> 8, bf16 -> 16, int8/fp8 -> 32.
    sublane = 8 * max(1, 4 // itemsize)

    # Rows of a 128-lane slab needed for n elements, rounded to the tile.
    rows = -(-n // _LANES)
    rows_p = -(-rows // sublane) * sublane
    padded = rows_p * _LANES

    # Block rows sized for the target block bytes in the native dtype.
    max_rows = (target_block_bytes // (_LANES * itemsize)) // sublane * sublane
    max_rows = max(sublane, max_rows)
    tm = min(rows_p, max_rows)

    # Ragged final block is handled by the pipeline (masked writes on blocked
    # dims) -- no rounding of rows_p up to a multiple of tm, no full-tensor pad.
    grid = (pl.cdiv(rows_p, tm),)

    x_flat = jnp.ravel(x)
    if padded != n:
        # Tail-only pad up to the (sublane x 128) tile; sliced off after the
        # kernel. Pad value is irrelevant to the valid region (elementwise op).
        x_flat = jnp.pad(x_flat, (0, padded - n))
    x2d = x_flat.reshape(rows_p, _LANES)

    # v7x: shard grid steps across the two TensorCores when there is enough
    # work; plain "parallel" elsewhere (near-zero codegen effect, but harmless).
    if is_v7 and grid[0] >= 2:
        dim_sem = (pltpu.CORE_PARALLEL,)
    else:
        dim_sem = ("parallel",)

    out2d = pl.pallas_call(
        _dispact_kernel,
        out_shape=jax.ShapeDtypeStruct((rows_p, _LANES), dtype),
        grid_spec=pltpu.PrefetchScalarGridSpec(
            num_scalar_prefetch=0,
            grid=grid,
            in_specs=[pl.BlockSpec((tm, _LANES), lambda i: (i, 0))],
            out_specs=pl.BlockSpec((tm, _LANES), lambda i: (i, 0)),
        ),
        compiler_params=pltpu.CompilerParams(
            dimension_semantics=dim_sem,
            vmem_limit_bytes=vmem_limit_bytes,
        ),
        cost_estimate=pl.CostEstimate(
            flops=5 * padded,
            transcendentals=2 * padded,
            bytes_accessed=2 * padded * itemsize,
        ),
    )(x2d)

    out = out2d.reshape(-1)
    if padded != n:
        out = out[:n]
    return out.reshape(orig_shape)


if __name__ == "__main__":
    key = jax.random.PRNGKey(0)
    # small activation tensor, NCHW-like: batch=2, channels=4, spatial=16x16
    x = jax.random.normal(key, (2, 4, 16, 16), dtype=jnp.float32) * 10.0
    y_ref = _dispact_jax(x)

    # Pallas path (forced: this tensor is tiny, so the default call would take
    # the fused-jnp small-input fallback instead of launching the kernel).
    y = jax.block_until_ready(disp_act(x, force_pallas=True))
    assert y.shape == x.shape and y.dtype == x.dtype
    assert jnp.allclose(y, y_ref, atol=1e-5, rtol=1e-5)

    # Non-tile-multiple element count -> exercises the tail pad/slice path.
    x2 = jax.random.normal(jax.random.PRNGKey(1), (3, 5, 7), dtype=jnp.float32) * 10.0
    y2 = jax.block_until_ready(disp_act(x2, force_pallas=True))
    assert jnp.allclose(y2, _dispact_jax(x2), atol=1e-5, rtol=1e-5)

    # Default path for tiny inputs (pure-jnp fallback) stays consistent.
    y3 = jax.block_until_ready(disp_act(x))
    assert jnp.allclose(y3, y_ref, atol=1e-5, rtol=1e-5)

    print("KERNEL_OK")
</pallas_src>

<mosaic_0001>
module attributes {stable_mosaic.version = 11 : i64} {
  func.func @_dispact_kernel(%arg0: i32, %arg1: memref<16x128xf32, #tpu.memory_space<vmem>>, %arg2: memref<16x128xf32, #tpu.memory_space<vmem>>) attributes {dimension_semantics = [#tpu.dimension_semantics<parallel>], iteration_bounds = array<i64: 1>, scalar_prefetch = 0 : i64, scratch_operands = 0 : i64, tpu.core_type = #tpu.core_type<tc>, window_params = [{transform_indices = @transform_0, window_bounds = array<i64: 16, 128>}, {transform_indices = @transform_1, window_bounds = array<i64: 16, 128>}]} {
    %c0 = arith.constant 0 : index
    %c0_0 = arith.constant 0 : index
    %0 = vector.load %arg1[%c0, %c0_0] : memref<16x128xf32, #tpu.memory_space<vmem>>, vector<16x128xf32>
    %cst = arith.constant 2.000000e+01 : f32
    %1 = vector.broadcast %cst : f32 to vector<16x128xf32>
    %2 = arith.minimumf %0, %1 : vector<16x128xf32>
    %cst_1 = arith.constant 2.000000e+01 : f32
    %3 = vector.broadcast %cst_1 : f32 to vector<16x128xf32>
    %4 = arith.cmpf ogt, %0, %3 : vector<16x128xf32>
    %5 = math.exp %2 : vector<16x128xf32>
    %6 = math.log1p %5 : vector<16x128xf32>
    %7 = arith.select %4, %0, %6 : vector<16x128xi1>, vector<16x128xf32>
    %cst_2 = arith.constant 9.99999974E-5 : f32
    %cst_3 = arith.constant 1.000000e+04 : f32
    %8 = vector.broadcast %cst_2 : f32 to vector<16x128xf32>
    %9 = arith.maximumf %8, %7 : vector<16x128xf32>
    %10 = vector.broadcast %cst_3 : f32 to vector<16x128xf32>
    %11 = arith.minimumf %10, %9 : vector<16x128xf32>
    %c0_4 = arith.constant 0 : index
    %c0_5 = arith.constant 0 : index
    %12 = vector.load %arg2[%c0_4, %c0_5] : memref<16x128xf32, #tpu.memory_space<vmem>>, vector<16x128xf32>
    tpu.vector_store %arg2[%c0_4, %c0_5], %11 {strides = array<i32>} : memref<16x128xf32, #tpu.memory_space<vmem>>, vector<16x128xf32>,
    return
  }
  func.func @transform_0(%arg0: i32) -> (i32, i32) {
    %c0_i32 = arith.constant 0 : i32
    %c0_i32_0 = arith.constant 0 : i32
    return %arg0, %c0_i32 : i32, i32
  }
  func.func @transform_1(%arg0: i32) -> (i32, i32) {
    %c0_i32 = arith.constant 0 : i32
    %c0_i32_0 = arith.constant 0 : i32
    return %arg0, %c0_i32 : i32, i32
  }
}

</mosaic_0001>

<llo_original>
// kernel: tpu_custom_call.1
$region0: #{tpu_custom_call.1}
  #allocation0 [shape = 'u32[]', space=smem, size = 0x4, offset = 0x4, fixed_abs, tag = 'smem constant byte address 0x4 - core index']
  #allocation1 [shape = 'u32[144,128]{1,0:T(1,128)}', space=vmem, size = 0x12000, scoped, tag = 'internal scratch']
  %s0 = inlined_call_operand.hbm [shape: f32[16,128], index: 0, kind: input, shape index: {}]
  %s1 = inlined_call_operand.hbm [shape: f32[16,128], index: 1, kind: output, shape index: {}]
  %s2 = sld [smem:[#allocation0]]
  $region18: #{tpu_custom_call.1} parent=0
    _
  %s4 = ssub.s32 1, %s2
  %s5 = scalar_select 0, %s4, %s2
  $region1: #{tpu_custom_call.1} parent=0
    #allocation2 [shape = 'u8[8192]{0}', space=vmem, size = 0x2000, scoped, tag = 'input window, operand 0, single buffered']
    #allocation3 [shape = 's32[1]{0}', space=sflag, size = 0x4, scoped, tag = 'scoped memory for tpu_custom_call.1']
    #allocation4 [shape = 's32[1]{0}', space=sflag, size = 0x4, scoped, tag = 'scoped memory for tpu_custom_call.1']
    #allocation5 [shape = 'u8[8192]{0}', space=vmem, size = 0x2000, scoped, tag = 'output window, operand 0, single buffered']
    %6 = vsyncpa [#allocation3], 0
    %7 = vsyncpa [#allocation4], 0
    // Predicated region
    $region2: #{tpu_custom_call.1} parent=1 // pred_check
      _
    $region3: #{tpu_custom_call.1} parent=1 // pred_check_branch
      %9 = sbr.rel (0) target = $region5
    $region4: #{tpu_custom_call.1} parent=1 // pred_region
      %s11 = ssub.s32 256, 256
      %12 = vsyncadd [#allocation3], %s11
      %s13 = sshll.u32 [#allocation2], 4
      %s14 = int_to_ptr.vmem [resolvable:$true] %s13
      %19 = dma.hbm_to_vmem [thread:$0]  %s0, 256, %s14, [#allocation3], 128, 128, 8
    $region5: #{tpu_custom_call.1} parent=1 // pred_fallthru
      _
    // Predicated region
    $region6: #{tpu_custom_call.1} parent=1 // pred_check
      _
    $region7: #{tpu_custom_call.1} parent=1 // pred_check_branch
      %21 = sbr.rel (0) target = $region9
    $region8: #{tpu_custom_call.1} parent=1 // pred_region
      %22 = dma.done [#allocation3], 256
    $region9: #{tpu_custom_call.1} parent=1 // pred_fallthru
      _
    %v23 = vld [vmem:[#allocation2] sm:$0xff]
    %v24 = vld [vmem:[#allocation2 + $0x8] sm:$0xff]
    %v25 = vmin.f32 %v23, 20.0
    %v26 = vmin.f32 %v24, 20.0
    %vm27 = vcmp.gt.f32.partialorder %v23, 20.0
    %vm28 = vcmp.gt.f32.partialorder %v24, 20.0
    %v29 = vmul.f32 %v25, 1.442695
    %v30 = vpow.pop %v29
    %v31 = vmul.f32 %v26, 1.442695
    %v32 = vpow.pop %v31
    %v33 = vadd.f32 %v30, 1.0
    %v34 = vlog2.pop %v33
    %v35 = vmul.f32 %v34, 0.6931472
    %v36 = vmul.f32 -0.5, %v30
    %v37 = vadd.f32 %v36, 1.0
    %v38 = vmul.f32 %v37, %v30
    %v39 = vand.u32 2147483647, %v30
    %vm40 = vcmp.lt.f32.partialorder %v39, 0.0004427343
    %v41 = vsel %vm40, %v38, %v35
    %v42 = vadd.f32 %v32, 1.0
    %v43 = vlog2.pop %v42
    %v44 = vmul.f32 %v43, 0.6931472
    %v45 = vmul.f32 -0.5, %v32
    %v46 = vadd.f32 %v45, 1.0
    %v47 = vmul.f32 %v46, %v32
    %v48 = vand.u32 2147483647, %v32
    %vm49 = vcmp.lt.f32.partialorder %v48, 0.0004427343
    %v50 = vsel %vm49, %v47, %v44
    %v51 = vsel %vm27, %v23, %v41
    %v52 = vsel %vm28, %v24, %v50
    %v53 = vmax.f32 %v51, 0.0001
    %v54 = vmax.f32 %v52, 0.0001
    %v55 = vmin.f32 %v53, 10000.0
    %v56 = vmin.f32 %v54, 10000.0
    %57 = vst [vmem:[#allocation5] sm:$0xff] %v55
    %58 = vst [vmem:[#allocation5 + $0x8] sm:$0xff] %v56
    // Predicated region
    $region10: #{tpu_custom_call.1} parent=1 // pred_check
      _
    $region11: #{tpu_custom_call.1} parent=1 // pred_check_branch
      %60 = sbr.rel (0) target = $region13
    $region12: #{tpu_custom_call.1} parent=1 // pred_region
      %s62 = ssub.s32 256, 256
      %63 = vsyncadd [#allocation4], %s62
      %s64 = sshll.u32 [#allocation5], 4
      %s65 = int_to_ptr.vmem [resolvable:$true] %s64
      %70 = dma.vmem_to_hbm [thread:$0]  %s65, 256, %s1, [#allocation4], 128, 128, 8
    $region13: #{tpu_custom_call.1} parent=1 // pred_fallthru
      _
    // Predicated region
    $region14: #{tpu_custom_call.1} parent=1 // pred_check
      _
    $region15: #{tpu_custom_call.1} parent=1 // pred_check_branch
      %72 = sbr.rel (0) target = $region17
    $region16: #{tpu_custom_call.1} parent=1 // pred_region
      %73 = dma.done [#allocation4], 256
    $region17: #{tpu_custom_call.1} parent=1 // pred_fallthru
      _
    %74 = vsyncpa [#allocation3], 1
    %75 = vsyncpa [#allocation4], 1

</llo_original>
